<compile_context>
chip_gen: v5e
topology: v5e:2x2
jax: 0.10.0
libtpu: 0.0.40
codegen_flags: <defaults>
</compile_context>

<pallas_src>
import functools

import jax
import jax.numpy as jnp
from jax.experimental import pallas as pl
from jax.experimental.pallas import tpu as pltpu

HIDDEN = 20      # hidden_channels (node feature width; = 2 * edge_output_dim)
EDGE_OUT = 10    # edge_output_dim (edge-MLP output width; one-hot width is also 10)
EDGE_HID = 128   # edge_hidden_dim
THRESHOLD = 0.4


# ----------------------------------------------------------------------------
# Fused kernel: edge features -> dense scatter -> message passing -> update
# ----------------------------------------------------------------------------
def _gnn_layer_kernel(ab_ref, hj_ref, hall_ref, ei_ref, d_ref,
                      ep1_ref, ew2b_ref, gb_ref, out_ref,
                      *, n_nodes, tile_j, threshold):
    n = n_nodes
    f = HIDDEN
    blk = pl.program_id(0)

    # ---- scalar parameters from SMEM ----
    a = ab_ref[0]
    b = ab_ref[1]

    # ---- edge-feature MLP (1 -> 128 -> relu -> 10), fused with one-hot bins ----
    d = d_ref[...]                                                    # (E, 1)
    e = d.shape[0]
    w1 = ep1_ref[0:1, :]                                              # (1, 128)
    b1 = ep1_ref[1:2, :]                                              # (1, 128)
    hmid = jnp.maximum(d * w1 + b1, 0.0)                              # (E, 128) fan-in 1 => broadcast
    mlp = (jnp.dot(hmid, ew2b_ref[0:EDGE_HID, :],
                   preferred_element_type=jnp.float32)
           + ew2b_ref[EDGE_HID:EDGE_HID + 1, :])                      # (E, 10)

    # one_hot_encode_distance: bin = int(d / (threshold/10)), clamp 10 -> 9.
    interval = threshold / 10.0
    bins = jnp.minimum(jnp.floor(d / interval).astype(jnp.int32), EDGE_OUT - 1)   # (E, 1)
    lanes = jax.lax.broadcasted_iota(jnp.int32, (e, EDGE_OUT), 1)
    one_hot = (lanes == bins).astype(jnp.float32)                     # (E, 10)

    # Combined edge features + trailing ones column (becomes adjacency after scatter).
    combined = jnp.concatenate(
        [one_hot, mlp, jnp.ones((e, 1), jnp.float32)], axis=1)        # (E, 21)

    # ---- densify only this block's TILE_J source rows via a selection matmul ----
    src = ei_ref[0:1, :]                                              # (1, E)
    dst = ei_ref[1:2, :]                                              # (1, E)
    pair = src * n + dst                                              # flat (j, j') id, j = SOURCE
    row0 = blk * tile_j * n
    rows = row0 + jax.lax.broadcasted_iota(jnp.int32, (tile_j * n, e), 0)
    sel = (rows == pair).astype(jnp.float32)                          # (TILE_J*N, E)
    dense = jnp.dot(sel, combined,
                    preferred_element_type=jnp.float32).reshape(tile_j, n, f + 1)
    W = dense[:, :, :f]                                               # (TILE_J, N, 20) edge feats
    adj = dense[:, :, f:f + 1]                                        # (TILE_J, N, 1)  1.0 iff edge

    # ---- message passing for the TILE_J nodes of this block ----
    hj = hj_ref[...]                                                  # (TILE_J, 20) h_j
    hp = hall_ref[...]                                                # (N, 20)      h_{j'}

    # rho(j, j') = |a*h_j - (1-a)*h_j'| ** b   (0 ** b == 0 since b > 0)
    base = jnp.abs(a * hj[:, None, :] - (1.0 - a) * hp[None, :, :])   # (TILE_J, N, 20)
    pos = base > 0.0
    rho = jnp.where(pos, jnp.exp(b * jnp.log(jnp.where(pos, base, 1.0))), 0.0)

    # w_tilde(j, j') = W[j,j'] / sum_{j'' in N(j)} W[j,j'']   (0.01 where the lane-sum is 0)
    sum_w = jnp.sum(W, axis=1, keepdims=True)                         # (TILE_J, 1, 20)
    nz = sum_w != 0.0
    inv = pl.reciprocal(jnp.where(nz, sum_w, 1.0), approx=True)       # EUP, nearly free
    w_tilde = jnp.where(nz, W * inv, 0.01)                            # (TILE_J, N, 20)

    # h_bar(j) = sum_{j' in N(j)} rho(j, j') * w_tilde(j, j')
    hbar = jnp.sum(adj * rho * w_tilde, axis=1)                       # (TILE_J, 20)

    # new_h(j) = sigmoid(gamma1 @ h_j + gamma2 @ h_bar_j + bias)  -- one fused matmul
    hcat = jnp.concatenate([hj, hbar], axis=1)                        # (TILE_J, 40)
    z = (jnp.dot(hcat, gb_ref[0:2 * f, :], preferred_element_type=jnp.float32)
         + gb_ref[2 * f:2 * f + 1, :])                                # (TILE_J, 20)
    new_h = jax.nn.sigmoid(z)

    # lanes 0:20 = new data.x[:,0,:] ; lanes 20:40 = data.x[:,1,:] (= h_bar)
    out_ref[...] = jnp.concatenate([new_h, hbar], axis=1)             # (TILE_J, 40)


# ----------------------------------------------------------------------------
# Wrapper
# ----------------------------------------------------------------------------
def couches_intermediaires_gnn(x, edge_index, edge_attr, params,
                               *, threshold=THRESHOLD, tile_j=8):
    """Fused forward pass.

    x:          (N, 2, 20) node features (torch data.x layout; channel 0 is used)
    edge_index: (2, E) int32, pre-coalesced edge list
    edge_attr:  (E, 1) f32 distances in (0, threshold]
    returns:    (N, 2, 20) — channel 0 = new_h, channel 1 = h_bar (new data.x)
    """
    n = x.shape[0]
    e = edge_index.shape[1]
    assert n % tile_j == 0, "pad N to a multiple of tile_j"  # TODO(synk): wrapper-side padding

    # Lane-dense inputs / packed parameters (fewer, denser DMAs).
    h = x[:, 0, :]                                                             # (N, 20)
    ei = edge_index.astype(jnp.int32)                                          # (2, E)
    ab = jnp.concatenate([params["a"].reshape(1), params["b"].reshape(1)])     # (2,) -> SMEM
    ep1 = jnp.concatenate([params["e_w1"].reshape(1, EDGE_HID),
                           params["e_b1"].reshape(1, EDGE_HID)], axis=0)       # (2, 128)
    ew2b = jnp.concatenate([params["e_w2"],
                            params["e_b2"].reshape(1, EDGE_OUT)], axis=0)      # (129, 10)
    gb = jnp.concatenate([params["gamma1_t"], params["gamma2_t"],
                          params["bias"].reshape(1, HIDDEN)], axis=0)          # (41, 20)

    kernel = functools.partial(_gnn_layer_kernel,
                               n_nodes=n, tile_j=tile_j, threshold=threshold)

    out = pl.pallas_call(
        kernel,
        grid=(n // tile_j,),
        in_specs=[
            pl.BlockSpec(memory_space=pltpu.MemorySpace.SMEM),              # ab scalars
            pl.BlockSpec((tile_j, HIDDEN), lambda i: (i, 0)),               # h_j block
            pl.BlockSpec((n, HIDDEN), lambda i: (0, 0)),                    # h all (resident)
            pl.BlockSpec((2, e), lambda i: (0, 0)),                         # edge_index
            pl.BlockSpec((e, 1), lambda i: (0, 0)),                         # distances
            pl.BlockSpec((2, EDGE_HID), lambda i: (0, 0)),                  # [w1; b1]
            pl.BlockSpec((EDGE_HID + 1, EDGE_OUT), lambda i: (0, 0)),       # [w2; b2]
            pl.BlockSpec((2 * HIDDEN + 1, HIDDEN), lambda i: (0, 0)),       # [g1^T; g2^T; bias]
        ],
        out_specs=pl.BlockSpec((tile_j, 2 * HIDDEN), lambda i: (i, 0)),
        out_shape=jax.ShapeDtypeStruct((n, 2 * HIDDEN), jnp.float32),
        compiler_params=pltpu.CompilerParams(
            dimension_semantics=("parallel",),          # both TCs on v7x
            vmem_limit_bytes=32 * 1024 * 1024),
    )(ab, h, h, ei, edge_attr, ep1, ew2b, gb)

    # (N, 40) -> (N, 2, 20): channel 0 = new_h, channel 1 = h_bar
    return out.reshape(n, 2, HIDDEN)


# ----------------------------------------------------------------------------
# Pure-JAX reference (same math, XLA scatter-based) for a correctness check
# ----------------------------------------------------------------------------
def _reference_forward(x, edge_index, edge_attr, params, threshold=THRESHOLD):
    n = x.shape[0]
    h = x[:, 0, :]
    a = params["a"][0]
    b = params["b"][0]
    hmid = jnp.maximum(edge_attr @ params["e_w1"] + params["e_b1"], 0.0)
    mlp = hmid @ params["e_w2"] + params["e_b2"]
    interval = threshold / 10.0
    idx = jnp.minimum(jnp.floor(edge_attr / interval).astype(jnp.int32), EDGE_OUT - 1)[:, 0]
    one_hot = jax.nn.one_hot(idx, EDGE_OUT, dtype=jnp.float32)
    comb = jnp.concatenate([one_hot, mlp], axis=1)                      # (E, 20)
    W = jnp.zeros((n, n, HIDDEN), jnp.float32).at[edge_index[0], edge_index[1]].set(comb)
    adj = jnp.zeros((n, n, 1), jnp.float32).at[edge_index[0], edge_index[1]].set(1.0)
    base = jnp.abs(a * h[:, None, :] - (1.0 - a) * h[None, :, :])
    rho = jnp.where(base > 0.0, base ** b, 0.0)
    sum_w = W.sum(axis=1, keepdims=True)
    nz = sum_w != 0.0
    w_tilde = jnp.where(nz, W / jnp.where(nz, sum_w, 1.0), 0.01)
    hbar = (adj * rho * w_tilde).sum(axis=1)
    new_h = jax.nn.sigmoid(h @ params["gamma1_t"] + hbar @ params["gamma2_t"]
                           + params["bias"][None, :])
    return jnp.stack([new_h, hbar], axis=1)


# ----------------------------------------------------------------------------
# Deterministic parameter construction (row-vector / transposed layouts)
# ----------------------------------------------------------------------------
def _linear_params(key, fan_in, fan_out):
    k1, k2 = jax.random.split(key)
    bound = 1.0 / float(fan_in) ** 0.5
    w = jax.random.uniform(k1, (fan_in, fan_out), minval=-bound, maxval=bound, dtype=jnp.float32)
    bias = jax.random.uniform(k2, (1, fan_out), minval=-bound, maxval=bound, dtype=jnp.float32)
    return w, bias


def init_params(key):
    ks = jax.random.split(key, 7)
    a = jax.random.uniform(ks[0], (1,), dtype=jnp.float32)                      # torch.rand(1)
    b = jax.random.uniform(ks[1], (1,), dtype=jnp.float32) + 1.0                # torch.rand(1) + 1
    gamma1_t = jax.random.uniform(ks[2], (HIDDEN, HIDDEN), dtype=jnp.float32)   # gamma1^T
    gamma2_t = jax.random.uniform(ks[3], (HIDDEN, HIDDEN), dtype=jnp.float32)   # gamma2^T
    bias = jax.random.uniform(ks[4], (HIDDEN,), dtype=jnp.float32)
    e_w1, e_b1 = _linear_params(ks[5], 1, EDGE_HID)        # Linear(1, 128) weight^T / bias
    e_w2, e_b2 = _linear_params(ks[6], EDGE_HID, EDGE_OUT)  # Linear(128, 10) weight^T / bias
    return dict(a=a, b=b, gamma1_t=gamma1_t, gamma2_t=gamma2_t, bias=bias,
                e_w1=e_w1, e_b1=e_b1, e_w2=e_w2, e_b2=e_b2)


if __name__ == "__main__":
    key = jax.random.PRNGKey(0)
    k_params, k_x, k_e = jax.random.split(key, 3)

    N = 8  # graph nodes (multiple of 8)

    # Directed edge list, already coalesced (sorted by (src, dst), unique):
    # each node has outgoing edges to (i+1)%N and (i+2)%N  ->  E = 16.
    edges = sorted({(i, (i + d) % N) for i in range(N) for d in (1, 2)})
    edge_index = jnp.array([[e[0] for e in edges],
                            [e[1] for e in edges]], dtype=jnp.int32)   # (2, E)
    E = int(edge_index.shape[1])

    # data.x: (N, 2, 20) — channel 0 is the node feature used by this layer.
    x = jax.random.uniform(k_x, (N, 2, HIDDEN), dtype=jnp.float32)
    # edge distances in (0, THRESHOLD]
    edge_attr = jax.random.uniform(k_e, (E, 1), minval=0.01, maxval=THRESHOLD, dtype=jnp.float32)

    params = init_params(k_params)

    out = couches_intermediaires_gnn(x, edge_index, edge_attr, params)
    jax.block_until_ready(out)
    assert out.shape == (N, 2, HIDDEN)

    ref = _reference_forward(x, edge_index, edge_attr, params)
    jax.block_until_ready(ref)
    assert jnp.allclose(out, ref, atol=5e-3, rtol=5e-3), "kernel / reference mismatch"

    print("KERNEL_OK")
</pallas_src>

<mosaic_0001>
module attributes {stable_mosaic.version = 11 : i64} {
  func.func @_gnn_layer_kernel(%arg0: i32, %arg1: memref<2xf32, #tpu.memory_space<smem>>, %arg2: memref<8x20xf32, #tpu.memory_space<vmem>>, %arg3: memref<8x20xf32, #tpu.memory_space<vmem>>, %arg4: memref<2x16xi32, #tpu.memory_space<vmem>>, %arg5: memref<16x1xf32, #tpu.memory_space<vmem>>, %arg6: memref<2x128xf32, #tpu.memory_space<vmem>>, %arg7: memref<129x10xf32, #tpu.memory_space<vmem>>, %arg8: memref<41x20xf32, #tpu.memory_space<vmem>>, %arg9: memref<8x40xf32, #tpu.memory_space<vmem>>) attributes {dimension_semantics = [#tpu.dimension_semantics<parallel>], iteration_bounds = array<i64: 1>, scalar_prefetch = 0 : i64, scratch_operands = 0 : i64, tpu.core_type = #tpu.core_type<tc>, window_params = [{transform_indices = @transform_0, window_bounds = array<i64: 2>}, {transform_indices = @transform_1, window_bounds = array<i64: 8, 20>}, {pipeline_mode = #tpu.pipeline_mode<synchronous>, transform_indices = @transform_2, window_bounds = array<i64: 8, 20>}, {pipeline_mode = #tpu.pipeline_mode<synchronous>, transform_indices = @transform_3, window_bounds = array<i64: 2, 16>}, {pipeline_mode = #tpu.pipeline_mode<synchronous>, transform_indices = @transform_4, window_bounds = array<i64: 16, 1>}, {pipeline_mode = #tpu.pipeline_mode<synchronous>, transform_indices = @transform_5, window_bounds = array<i64: 2, 128>}, {pipeline_mode = #tpu.pipeline_mode<synchronous>, transform_indices = @transform_6, window_bounds = array<i64: 129, 10>}, {pipeline_mode = #tpu.pipeline_mode<synchronous>, transform_indices = @transform_7, window_bounds = array<i64: 41, 20>}, {transform_indices = @transform_8, window_bounds = array<i64: 8, 40>}]} {
    %c0 = arith.constant 0 : index
    %0 = memref.load %arg1[%c0] : memref<2xf32, #tpu.memory_space<smem>>
    %c1 = arith.constant 1 : index
    %1 = memref.load %arg1[%c1] : memref<2xf32, #tpu.memory_space<smem>>
    %c0_0 = arith.constant 0 : index
    %c0_1 = arith.constant 0 : index
    %2 = vector.load %arg5[%c0_0, %c0_1] : memref<16x1xf32, #tpu.memory_space<vmem>>, vector<16x1xf32>
    %c0_2 = arith.constant 0 : index
    %c0_3 = arith.constant 0 : index
    %3 = vector.load %arg6[%c0_2, %c0_3] : memref<2x128xf32, #tpu.memory_space<vmem>>, vector<1x128xf32>
    %c1_4 = arith.constant 1 : index
    %c0_5 = arith.constant 0 : index
    %4 = vector.load %arg6[%c1_4, %c0_5] : memref<2x128xf32, #tpu.memory_space<vmem>>, vector<1x128xf32>
    %5 = vector.broadcast %2 : vector<16x1xf32> to vector<16x128xf32>
    %6 = vector.broadcast %3 : vector<1x128xf32> to vector<16x128xf32>
    %7 = arith.mulf %5, %6 : vector<16x128xf32>
    %8 = vector.broadcast %4 : vector<1x128xf32> to vector<16x128xf32>
    %9 = arith.addf %7, %8 : vector<16x128xf32>
    %cst = arith.constant 0.000000e+00 : f32
    %10 = vector.broadcast %cst : f32 to vector<16x128xf32>
    %11 = arith.maximumf %9, %10 : vector<16x128xf32>
    %c0_6 = arith.constant 0 : index
    %c0_7 = arith.constant 0 : index
    %12 = vector.load %arg7[%c0_6, %c0_7] : memref<129x10xf32, #tpu.memory_space<vmem>>, vector<128x10xf32>
    %cst_8 = arith.constant dense<0.000000e+00> : vector<16x10xf32>
    %13 = tpu.matmul %11, %12, %cst_8 {dimension_numbers = #tpu.dot_dimension_numbers<[1], [0], [0], [1], [0, 0, 1, 1], [], []>} : vector<16x128xf32>, vector<128x10xf32>, vector<16x10xf32> -> vector<16x10xf32>
    %c128 = arith.constant 128 : index
    %c0_9 = arith.constant 0 : index
    %14 = vector.load %arg7[%c128, %c0_9] : memref<129x10xf32, #tpu.memory_space<vmem>>, vector<1x10xf32>
    %15 = vector.broadcast %14 : vector<1x10xf32> to vector<16x10xf32>
    %16 = arith.addf %13, %15 : vector<16x10xf32>
    %cst_10 = arith.constant 4.000000e-02 : f32
    %17 = vector.broadcast %cst_10 : f32 to vector<16x1xf32>
    %18 = arith.divf %2, %17 : vector<16x1xf32>
    %19 = math.floor %18 : vector<16x1xf32>
    %20 = arith.fptosi %19 : vector<16x1xf32> to vector<16x1xi32>
    %c9_i32 = arith.constant 9 : i32
    %21 = vector.broadcast %c9_i32 : i32 to vector<16x1xi32>
    %22 = arith.minsi %20, %21 : vector<16x1xi32>
    %23 = tpu.iota {dimensions = array<i32: 1>} : vector<16x10xi32>
    %24 = vector.broadcast %22 : vector<16x1xi32> to vector<16x10xi32>
    %25 = arith.cmpi eq, %23, %24 : vector<16x10xi32>
    %26 = arith.extui %25 : vector<16x10xi1> to vector<16x10xi32>
    %27 = arith.sitofp %26 : vector<16x10xi32> to vector<16x10xf32>
    %cst_11 = arith.constant 1.000000e+00 : f32
    %28 = vector.broadcast %cst_11 : f32 to vector<16x1xf32>
    %29 = tpu.concatenate %27, %16, %28 in 1 : vector<16x10xf32>, vector<16x10xf32>, vector<16x1xf32> -> vector<16x21xf32>
    %c0_12 = arith.constant 0 : index
    %c0_13 = arith.constant 0 : index
    %30 = vector.load %arg4[%c0_12, %c0_13] : memref<2x16xi32, #tpu.memory_space<vmem>>, vector<1x16xi32>
    %c1_14 = arith.constant 1 : index
    %c0_15 = arith.constant 0 : index
    %31 = vector.load %arg4[%c1_14, %c0_15] : memref<2x16xi32, #tpu.memory_space<vmem>>, vector<1x16xi32>
    %c8_i32 = arith.constant 8 : i32
    %32 = vector.broadcast %c8_i32 : i32 to vector<1x16xi32>
    %33 = arith.muli %30, %32 : vector<1x16xi32>
    %34 = arith.addi %33, %31 : vector<1x16xi32>
    %c8_i32_16 = arith.constant 8 : i32
    %35 = arith.muli %arg0, %c8_i32_16 : i32
    %c8_i32_17 = arith.constant 8 : i32
    %36 = arith.muli %35, %c8_i32_17 : i32
    %37 = tpu.iota {dimensions = array<i32: 0>} : vector<64x16xi32>
    %38 = vector.broadcast %36 : i32 to vector<64x16xi32>
    %39 = arith.addi %38, %37 : vector<64x16xi32>
    %40 = vector.broadcast %34 : vector<1x16xi32> to vector<64x16xi32>
    %41 = arith.cmpi eq, %39, %40 : vector<64x16xi32>
    %42 = arith.extui %41 : vector<64x16xi1> to vector<64x16xi32>
    %43 = arith.sitofp %42 : vector<64x16xi32> to vector<64x16xf32>
    %cst_18 = arith.constant dense<0.000000e+00> : vector<64x21xf32>
    %44 = tpu.matmul %43, %29, %cst_18 {dimension_numbers = #tpu.dot_dimension_numbers<[1], [0], [0], [1], [0, 0, 1, 1], [], []>} : vector<64x16xf32>, vector<16x21xf32>, vector<64x21xf32> -> vector<64x21xf32>
    %45 = vector.shape_cast %44 : vector<64x21xf32> to vector<8x8x21xf32>
    %46 = vector.extract_strided_slice %45 {offsets = [0, 0, 0], sizes = [8, 8, 20], strides = [1, 1, 1]} : vector<8x8x21xf32> to vector<8x8x20xf32>
    %47 = vector.extract_strided_slice %45 {offsets = [0, 0, 20], sizes = [8, 8, 1], strides = [1, 1, 1]} : vector<8x8x21xf32> to vector<8x8x1xf32>
    %c0_19 = arith.constant 0 : index
    %c0_20 = arith.constant 0 : index
    %48 = vector.load %arg2[%c0_19, %c0_20] : memref<8x20xf32, #tpu.memory_space<vmem>>, vector<8x20xf32>
    %c0_21 = arith.constant 0 : index
    %c0_22 = arith.constant 0 : index
    %49 = vector.load %arg3[%c0_21, %c0_22] : memref<8x20xf32, #tpu.memory_space<vmem>>, vector<8x20xf32>
    %50 = vector.shape_cast %48 : vector<8x20xf32> to vector<8x1x20xf32>
    %51 = vector.broadcast %0 : f32 to vector<8x1x20xf32>
    %52 = arith.mulf %51, %50 : vector<8x1x20xf32>
    %cst_23 = arith.constant 1.000000e+00 : f32
    %53 = arith.subf %cst_23, %0 : f32
    %54 = vector.shape_cast %49 : vector<8x20xf32> to vector<1x8x20xf32>
    %55 = vector.broadcast %53 : f32 to vector<1x8x20xf32>
    %56 = arith.mulf %55, %54 : vector<1x8x20xf32>
    %57 = vector.broadcast %52 : vector<8x1x20xf32> to vector<8x8x20xf32>
    %58 = vector.broadcast %56 : vector<1x8x20xf32> to vector<8x8x20xf32>
    %59 = arith.subf %57, %58 : vector<8x8x20xf32>
    %60 = math.absf %59 : vector<8x8x20xf32>
    %cst_24 = arith.constant 0.000000e+00 : f32
    %61 = vector.broadcast %cst_24 : f32 to vector<8x8x20xf32>
    %62 = arith.cmpf ogt, %60, %61 : vector<8x8x20xf32>
    %cst_25 = arith.constant 1.000000e+00 : f32
    %63 = vector.broadcast %cst_25 : f32 to vector<8x8x20xf32>
    %64 = arith.select %62, %60, %63 : vector<8x8x20xi1>, vector<8x8x20xf32>
    %65 = math.log %64 : vector<8x8x20xf32>
    %66 = vector.broadcast %1 : f32 to vector<8x8x20xf32>
    %67 = arith.mulf %66, %65 : vector<8x8x20xf32>
    %68 = math.exp %67 : vector<8x8x20xf32>
    %cst_26 = arith.constant 0.000000e+00 : f32
    %69 = vector.broadcast %cst_26 : f32 to vector<8x8x20xf32>
    %70 = arith.select %62, %68, %69 : vector<8x8x20xi1>, vector<8x8x20xf32>
    %cst_27 = arith.constant dense<0.000000e+00> : vector<8x20xf32>
    %71 = vector.multi_reduction <add>, %46, %cst_27 [1] : vector<8x8x20xf32> to vector<8x20xf32>
    %72 = vector.shape_cast %71 : vector<8x20xf32> to vector<8x1x20xf32>
    %cst_28 = arith.constant 0.000000e+00 : f32
    %73 = vector.broadcast %cst_28 : f32 to vector<8x1x20xf32>
    %74 = arith.cmpf one, %72, %73 : vector<8x1x20xf32>
    %cst_29 = arith.constant 1.000000e+00 : f32
    %75 = vector.broadcast %cst_29 : f32 to vector<8x1x20xf32>
    %76 = arith.select %74, %72, %75 : vector<8x1x20xi1>, vector<8x1x20xf32>
    %77 = tpu.reciprocal %76 {approx = true} : vector<8x1x20xf32> -> vector<8x1x20xf32>
    %78 = vector.broadcast %77 : vector<8x1x20xf32> to vector<8x8x20xf32>
    %79 = arith.mulf %46, %78 : vector<8x8x20xf32>
    %cst_30 = arith.constant 0.00999999977 : f32
    %80 = vector.shape_cast %74 : vector<8x1x20xi1> to vector<8x1x20xi1>
    %81 = vector.broadcast %80 : vector<8x1x20xi1> to vector<8x8x20xi1>
    %82 = vector.broadcast %cst_30 : f32 to vector<8x8x20xf32>
    %83 = arith.select %81, %79, %82 : vector<8x8x20xi1>, vector<8x8x20xf32>
    %84 = vector.broadcast %47 : vector<8x8x1xf32> to vector<8x8x20xf32>
    %85 = arith.mulf %84, %70 : vector<8x8x20xf32>
    %86 = arith.mulf %85, %83 : vector<8x8x20xf32>
    %cst_31 = arith.constant dense<0.000000e+00> : vector<8x20xf32>
    %87 = vector.multi_reduction <add>, %86, %cst_31 [1] : vector<8x8x20xf32> to vector<8x20xf32>
    %88 = tpu.concatenate %48, %87 in 1 : vector<8x20xf32>, vector<8x20xf32> -> vector<8x40xf32>
    %c0_32 = arith.constant 0 : index
    %c0_33 = arith.constant 0 : index
    %89 = vector.load %arg8[%c0_32, %c0_33] : memref<41x20xf32, #tpu.memory_space<vmem>>, vector<40x20xf32>
    %cst_34 = arith.constant dense<0.000000e+00> : vector<8x20xf32>
    %90 = tpu.matmul %88, %89, %cst_34 {dimension_numbers = #tpu.dot_dimension_numbers<[1], [0], [0], [1], [0, 0, 1, 1], [], []>} : vector<8x40xf32>, vector<40x20xf32>, vector<8x20xf32> -> vector<8x20xf32>
    %c40 = arith.constant 40 : index
    %c0_35 = arith.constant 0 : index
    %91 = vector.load %arg8[%c40, %c0_35] : memref<41x20xf32, #tpu.memory_space<vmem>>, vector<1x20xf32>
    %92 = vector.broadcast %91 : vector<1x20xf32> to vector<8x20xf32>
    %93 = arith.addf %90, %92 : vector<8x20xf32>
    %94 = arith.negf %93 : vector<8x20xf32>
    %95 = math.exp %94 : vector<8x20xf32>
    %cst_36 = arith.constant 1.000000e+00 : f32
    %96 = vector.broadcast %cst_36 : f32 to vector<8x20xf32>
    %97 = arith.addf %96, %95 : vector<8x20xf32>
    %98 = arith.divf %96, %97 : vector<8x20xf32>
    %99 = tpu.concatenate %98, %87 in 1 : vector<8x20xf32>, vector<8x20xf32> -> vector<8x40xf32>
    %c0_37 = arith.constant 0 : index
    %c0_38 = arith.constant 0 : index
    %100 = vector.load %arg9[%c0_37, %c0_38] : memref<8x40xf32, #tpu.memory_space<vmem>>, vector<8x40xf32>
    tpu.vector_store %arg9[%c0_37, %c0_38], %99 {strides = array<i32>} : memref<8x40xf32, #tpu.memory_space<vmem>>, vector<8x40xf32>,
    return
  }
  func.func @transform_0(%arg0: i32) -> i32 {
    %c0_i32 = arith.constant 0 : i32
    %c0_i32_0 = arith.constant 0 : i32
    return %c0_i32 : i32
  }
  func.func @transform_1(%arg0: i32) -> (i32, i32) {
    %c0_i32 = arith.constant 0 : i32
    %c0_i32_0 = arith.constant 0 : i32
    return %arg0, %c0_i32 : i32, i32
  }
  func.func @transform_2(%arg0: i32) -> (i32, i32) {
    %c0_i32 = arith.constant 0 : i32
    %c0_i32_0 = arith.constant 0 : i32
    %c0_i32_1 = arith.constant 0 : i32
    return %c0_i32, %c0_i32_0 : i32, i32
  }
  func.func @transform_3(%arg0: i32) -> (i32, i32) {
    %c0_i32 = arith.constant 0 : i32
    %c0_i32_0 = arith.constant 0 : i32
    %c0_i32_1 = arith.constant 0 : i32
    return %c0_i32, %c0_i32_0 : i32, i32
  }
  func.func @transform_4(%arg0: i32) -> (i32, i32) {
    %c0_i32 = arith.constant 0 : i32
    %c0_i32_0 = arith.constant 0 : i32
    %c0_i32_1 = arith.constant 0 : i32
    return %c0_i32, %c0_i32_0 : i32, i32
  }
  func.func @transform_5(%arg0: i32) -> (i32, i32) {
    %c0_i32 = arith.constant 0 : i32
    %c0_i32_0 = arith.constant 0 : i32
    %c0_i32_1 = arith.constant 0 : i32
    return %c0_i32, %c0_i32_0 : i32, i32
  }
  func.func @transform_6(%arg0: i32) -> (i32, i32) {
    %c0_i32 = arith.constant 0 : i32
    %c0_i32_0 = arith.constant 0 : i32
    %c0_i32_1 = arith.constant 0 : i32
    return %c0_i32, %c0_i32_0 : i32, i32
  }
  func.func @transform_7(%arg0: i32) -> (i32, i32) {
    %c0_i32 = arith.constant 0 : i32
    %c0_i32_0 = arith.constant 0 : i32
    %c0_i32_1 = arith.constant 0 : i32
    return %c0_i32, %c0_i32_0 : i32, i32
  }
  func.func @transform_8(%arg0: i32) -> (i32, i32) {
    %c0_i32 = arith.constant 0 : i32
    %c0_i32_0 = arith.constant 0 : i32
    return %arg0, %c0_i32 : i32, i32
  }
}

</mosaic_0001>

<llo_original>
// kernel: tpu_custom_call.1
$region0: #{tpu_custom_call.1}
  #allocation0 [shape = 'u32[]', space=smem, size = 0x4, offset = 0x4, fixed_abs, tag = 'smem constant byte address 0x4 - core index']
  #allocation1 [shape = 'u32[72,128]{1,0:T(1,128)}', space=vmem, size = 0x9000, scoped, tag = 'internal scratch']
  %s0 = inlined_call_operand.vmem [shape: f32[2], index: 0, kind: input, shape index: {}]
  %s1 = inlined_call_operand.vmem [shape: f32[8,20], index: 1, kind: input, shape index: {}]
  %s2 = inlined_call_operand.vmem [shape: f32[8,20], index: 2, kind: input, shape index: {}]
  %s3 = inlined_call_operand.vmem [shape: s32[2,16], index: 3, kind: input, shape index: {}]
  %s4 = inlined_call_operand.vmem [shape: f32[16,1], index: 4, kind: input, shape index: {}]
  %s5 = inlined_call_operand.vmem [shape: f32[2,128], index: 5, kind: input, shape index: {}]
  %s6 = inlined_call_operand.vmem [shape: f32[129,10], index: 6, kind: input, shape index: {}]
  %s7 = inlined_call_operand.vmem [shape: f32[41,20], index: 7, kind: input, shape index: {}]
  %s8 = inlined_call_operand.hbm [shape: f32[8,40], index: 8, kind: output, shape index: {}]
  %s9 = sld [smem:[#allocation0]]
  $region46: #{tpu_custom_call.1} parent=0
    _
  %s11 = ssub.s32 1, %s9
  %s12 = scalar_select 0, %s11, %s9
  $region1: #{tpu_custom_call.1} parent=0
    #allocation2 [shape = 'u8[512]{0}', space=smem, size = 0x200, scoped, tag = 'input window, operand 0, single buffered']
    #allocation3 [shape = 's32[1]{0}', space=sflag, size = 0x4, scoped, tag = 'scoped memory for tpu_custom_call.1']
    #allocation4 [shape = 's32[1]{0}', space=sflag, size = 0x4, scoped, tag = 'scoped memory for tpu_custom_call.1']
    #allocation5 [shape = 'u8[4096]{0}', space=vmem, size = 0x1000, scoped, tag = 'output window, operand 0, single buffered']
    %13 = vsyncpa [#allocation4], 0
    %14 = vsyncpa [#allocation3], 0
    // Predicated region
    $region2: #{tpu_custom_call.1} parent=1 // pred_check
      _
    $region3: #{tpu_custom_call.1} parent=1 // pred_check_branch
      %16 = sbr.rel (0) target = $region5
    $region4: #{tpu_custom_call.1} parent=1 // pred_region
      %18 = vsyncadd [#allocation4], 0
      %s20 = sshll.u32 %s0, 4
      %s21 = int_to_ptr.vmem [resolvable:$true] %s20
      %23 = dma.vmem_to_smem %s21, 16, [#allocation2], [#allocation4]
    $region5: #{tpu_custom_call.1} parent=1 // pred_fallthru
      _
    // Predicated region
    $region6: #{tpu_custom_call.1} parent=1 // pred_check
      _
    $region7: #{tpu_custom_call.1} parent=1 // pred_check_branch
      %25 = sbr.rel (0) target = $region9
    $region8: #{tpu_custom_call.1} parent=1 // pred_region
      _
    $region9: #{tpu_custom_call.1} parent=1 // pred_fallthru
      _
    // Predicated region
    $region10: #{tpu_custom_call.1} parent=1 // pred_check
      _
    $region11: #{tpu_custom_call.1} parent=1 // pred_check_branch
      %27 = sbr.rel (0) target = $region13
    $region12: #{tpu_custom_call.1} parent=1 // pred_region
      _
    $region13: #{tpu_custom_call.1} parent=1 // pred_fallthru
      _
    // Predicated region
    $region14: #{tpu_custom_call.1} parent=1 // pred_check
      _
    $region15: #{tpu_custom_call.1} parent=1 // pred_check_branch
      %29 = sbr.rel (0) target = $region17
    $region16: #{tpu_custom_call.1} parent=1 // pred_region
      _
    $region17: #{tpu_custom_call.1} parent=1 // pred_fallthru
      _
    // Predicated region
    $region18: #{tpu_custom_call.1} parent=1 // pred_check
      _
    $region19: #{tpu_custom_call.1} parent=1 // pred_check_branch
      %31 = sbr.rel (0) target = $region21
    $region20: #{tpu_custom_call.1} parent=1 // pred_region
      _
    $region21: #{tpu_custom_call.1} parent=1 // pred_fallthru
      _
    // Predicated region
    $region22: #{tpu_custom_call.1} parent=1 // pred_check
      _
    $region23: #{tpu_custom_call.1} parent=1 // pred_check_branch
      %33 = sbr.rel (0) target = $region25
    $region24: #{tpu_custom_call.1} parent=1 // pred_region
      _
    $region25: #{tpu_custom_call.1} parent=1 // pred_fallthru
      _
    // Predicated region
    $region26: #{tpu_custom_call.1} parent=1 // pred_check
      _
    $region27: #{tpu_custom_call.1} parent=1 // pred_check_branch
      %35 = sbr.rel (0) target = $region29
    $region28: #{tpu_custom_call.1} parent=1 // pred_region
      _
    $region29: #{tpu_custom_call.1} parent=1 // pred_fallthru
      _
    // Predicated region
    $region30: #{tpu_custom_call.1} parent=1 // pred_check
      _
    $region31: #{tpu_custom_call.1} parent=1 // pred_check_branch
      %37 = sbr.rel (0) target = $region33
    $region32: #{tpu_custom_call.1} parent=1 // pred_region
      _
    $region33: #{tpu_custom_call.1} parent=1 // pred_fallthru
      _
    // Predicated region
    $region34: #{tpu_custom_call.1} parent=1 // pred_check
      _
    $region35: #{tpu_custom_call.1} parent=1 // pred_check_branch
      %39 = sbr.rel (0) target = $region37
    $region36: #{tpu_custom_call.1} parent=1 // pred_region
      %41 = dma.done [#allocation4], 16
    $region37: #{tpu_custom_call.1} parent=1 // pred_fallthru
      _
    %42 = sfence
    %s43 = sld [smem:[#allocation2]]
    %s44 = sld [smem:[#allocation2 + $0x1]]
    %v45 = vld [vmem:[%s4] sm:$0xff]
    %v46 = vld [vmem:[%s4 + $0x8] sm:$0xff]
    %v47 = vld [vmem:[%s5] sm:$0x1]
    %v48 = vld [vmem:[%s5 + $0x1] sm:$0x1]
    %50 = vset.pattern.permute.xlu0 0
    %51 = vperm.xlu0 %50, %v45
    %v52 = vpop.permute.xlu0 %51
    %55 = vset.pattern.permute.xlu0 0
    %56 = vperm.xlu0 %55, %v46
    %v57 = vpop.permute.xlu0 %56
    %v59 = vperm.slane %v47, 0
    %v60 = vmul.f32 %v52, %v59
    %v61 = vmul.f32 %v57, %v59
    %v62 = vperm.slane %v48, 0
    %v63 = vadd.f32 %v60, %v62
    %v64 = vadd.f32 %v61, %v62
    %v65 = vmax.f32 %v63, 0.0
    %v66 = vmax.f32 %v64, 0.0
    %v67 = vld [vmem:[%s6] sm:$0xff]
    %v68 = vld [vmem:[%s6 + $0x8] sm:$0xff]
    %v69 = vld [vmem:[%s6 + $0x10] sm:$0xff]
    %v70 = vld [vmem:[%s6 + $0x18] sm:$0xff]
    %v71 = vld [vmem:[%s6 + $0x20] sm:$0xff]
    %v72 = vld [vmem:[%s6 + $0x28] sm:$0xff]
    %v73 = vld [vmem:[%s6 + $0x30] sm:$0xff]
    %v74 = vld [vmem:[%s6 + $0x38] sm:$0xff]
    %v75 = vld [vmem:[%s6 + $0x40] sm:$0xff]
    %v76 = vld [vmem:[%s6 + $0x48] sm:$0xff]
    %v77 = vld [vmem:[%s6 + $0x50] sm:$0xff]
    %v78 = vld [vmem:[%s6 + $0x58] sm:$0xff]
    %v79 = vld [vmem:[%s6 + $0x60] sm:$0xff]
    %v80 = vld [vmem:[%s6 + $0x68] sm:$0xff]
    %v81 = vld [vmem:[%s6 + $0x70] sm:$0xff]
    %v82 = vld [vmem:[%s6 + $0x78] sm:$0xff]
    %v83 = vld [vmem:[%s6 + $0x80] sm:$0x1]
    %v84 = vperm.slane %v83, 0
    %85 = vmatpush.msra.mxu0 %v82
    %86 = vmatpush.msra.mxu0 %v81
    %87 = vmatpush.msra.mxu0 %v80
    %88 = vmatpush.msra.mxu0 %v79
    %89 = vmatpush.msra.mxu0 %v78
    %90 = vmatpush.msra.mxu0 %v77
    %91 = vmatpush.msra.mxu0 %v76
    %92 = vmatpush.msra.mxu0 %v75
    %93 = vmatpush.msra.mxu0 %v74
    %94 = vmatpush.msra.mxu0 %v73
    %95 = vmatpush.msra.mxu0 %v72
    %96 = vmatpush.msra.mxu0 %v71
    %97 = vmatpush.msra.mxu0 %v70
    %98 = vmatpush.msra.mxu0 %v69
    %99 = vmatpush.msra.mxu0 %v68
    %100 = vmatpush.msra.mxu0 %v67
    %101 = vmatmul.f32.gmra.mxu0 %v65
    %v102 = vpop.f32.mrf.mxu0
    %v103 = vadd.f32 %v84, %v102
    %104 = vmatmul.f32.gmra.mxu0 %v66
    %v105 = vpop.f32.mrf.mxu0
    %v106 = vadd.f32 %v84, %v105
    %107 = vdwg.mxu0
    %v108 = vrcp.pop 0.04
    %v109 = vmul.f32 0.04, %v108
    %v110 = vsub.f32 1.0, %v109
    %v111 = vmul.f32 %v108, %v110
    %v112 = vadd.f32 %v108, %v111
    %vm113 = vweird.f32 %v108
    %v114 = vsel %vm113, %v108, %v112
    %v115 = vmul.f32 %v45, %v114
    %v116 = vmul.f32 %v46, %v114
    %v117 = vfloor.f32 %v115
    %v118 = vfloor.f32 %v116
    %v119 = vcvt.f32.s32.to.zero.pseudo %v117
    %v120 = vcvt.f32.s32.to.zero.pseudo %v118
    %vm121 = vcmp.lt.s32.totalorder %v119, 9
    %v122 = vsel %vm121, %v119, 9
    %vm123 = vcmp.lt.s32.totalorder %v120, 9
    %v124 = vsel %vm123, %v120, 9
    %v125 = vlaneseq
    %v126 = vand.u32 %v125, 127
    %127 = vset.pattern.permute.xlu0 0
    %128 = vperm.xlu0 %127, %v122
    %v129 = vpop.permute.xlu0 %128
    %130 = vset.pattern.permute.xlu0 0
    %131 = vperm.xlu0 %130, %v124
    %v132 = vpop.permute.xlu0 %131
    %vm133 = vcmp.eq.s32.totalorder %v126, %v129
    %vm134 = vcmp.eq.s32.totalorder %v126, %v132
    %v135 = vsel %vm133, 1, 0
    %v136 = vsel %vm134, 1, 0
    %v137 = vcvt.s32.f32 %v135
    %v138 = vcvt.s32.f32 %v136
    %141 = vrot.lane.b32.xlu0 %v103, 10
    %v142 = vpop.permute.xlu0 %141
    %143 = vrot.lane.b32.xlu0 %v106, 10
    %v144 = vpop.permute.xlu0 %143
    %vm147 = vcmask 80896
    %v148 = vsel %vm147, %v137, %v142
    %v149 = vsel %vm147, %v138, %v144
    %vm150 = vcmask 162816
    %v151 = vsel %vm150, %v148, 1.0
    %v152 = vsel %vm150, %v149, 1.0
    %v153 = vld [vmem:[%s3] sm:$0x1]
    %v154 = vld [vmem:[%s3 + $0x1] sm:$0x1]
    %v155 = vmul.u32 %v153, 8
    %v156 = vadd.s32 %v155, %v154
    %s157 = smul.u32 0, 64
    %v158 = vlaneseq
    %v159 = vshrl.u32 %v158, 7
    %v160 = vadd.s32 %v159, 8
    %v161 = vadd.s32 %v159, 16
    %v162 = vadd.s32 %v159, 24
    %v163 = vadd.s32 %v159, 32
    %v164 = vadd.s32 %v159, 40
    %v165 = vadd.s32 %v159, 48
    %v166 = vadd.s32 %v159, 56
    %v167 = vstv %s157
    %v168 = vadd.s32 %v167, %v159
    %v169 = vadd.s32 %v167, %v160
    %v170 = vadd.s32 %v167, %v161
    %v171 = vadd.s32 %v167, %v162
    %v172 = vadd.s32 %v167, %v163
    %v173 = vadd.s32 %v167, %v164
    %v174 = vadd.s32 %v167, %v165
    %v175 = vadd.s32 %v167, %v166
    %v176 = vperm.slane %v156, 0
    %vm177 = vcmp.eq.s32.totalorder %v168, %v176
    %vm178 = vcmp.eq.s32.totalorder %v169, %v176
    %vm179 = vcmp.eq.s32.totalorder %v170, %v176
    %vm180 = vcmp.eq.s32.totalorder %v171, %v176
    %vm181 = vcmp.eq.s32.totalorder %v172, %v176
    %vm182 = vcmp.eq.s32.totalorder %v173, %v176
    %vm183 = vcmp.eq.s32.totalorder %v174, %v176
    %vm184 = vcmp.eq.s32.totalorder %v175, %v176
    %v185 = vsel %vm177, 1, 0
    %v186 = vsel %vm178, 1, 0
    %v187 = vsel %vm179, 1, 0
    %v188 = vsel %vm180, 1, 0
    %v189 = vsel %vm181, 1, 0
    %v190 = vsel %vm182, 1, 0
    %v191 = vsel %vm183, 1, 0
    %v192 = vsel %vm184, 1, 0
    %v193 = vcvt.s32.f32 %v185
    %v194 = vcvt.s32.f32 %v186
    %v195 = vcvt.s32.f32 %v187
    %v196 = vcvt.s32.f32 %v188
    %v197 = vcvt.s32.f32 %v189
    %v198 = vcvt.s32.f32 %v190
    %v199 = vcvt.s32.f32 %v191
    %v200 = vcvt.s32.f32 %v192
    %vm201 = vcmask 130048
    %v203 = vsel %vm201, %v193, 0
    %v206 = vsel %vm201, %v194, 0
    %v209 = vsel %vm201, %v195, 0
    %v212 = vsel %vm201, %v196, 0
    %v215 = vsel %vm201, %v197, 0
    %v218 = vsel %vm201, %v198, 0
    %v221 = vsel %vm201, %v199, 0
    %v224 = vsel %vm201, %v200, 0
    %226 = vmatpush.msra.mxu0 0.0
    %227 = vmatpush.msra.mxu0 0.0
    %228 = vmatpush.msra.mxu0 0.0
    %229 = vmatpush.msra.mxu0 0.0
    %230 = vmatpush.msra.mxu0 0.0
    %231 = vmatpush.msra.mxu0 0.0
    %232 = vmatpush.msra.mxu0 0.0
    %233 = vmatpush.msra.mxu0 0.0
    %234 = vmatpush.msra.mxu0 0.0
    %235 = vmatpush.msra.mxu0 0.0
    %236 = vmatpush.msra.mxu0 0.0
    %237 = vmatpush.msra.mxu0 0.0
    %238 = vmatpush.msra.mxu0 0.0
    %239 = vmatpush.msra.mxu0 0.0
    %240 = vmatpush.msra.mxu0 %v152
    %241 = vmatpush.msra.mxu0 %v151
    %242 = vmatmul.f32.gmra.mxu0 %v203
    %v243 = vpop.f32.mrf.mxu0
    %v244 = vadd.f32 0.0, %v243
    %245 = vmatmul.f32.gmra.mxu0 %v206
    %v246 = vpop.f32.mrf.mxu0
    %v247 = vadd.f32 0.0, %v246
    %248 = vmatmul.f32.gmra.mxu0 %v209
    %v249 = vpop.f32.mrf.mxu0
    %v250 = vadd.f32 0.0, %v249
    %251 = vmatmul.f32.gmra.mxu0 %v212
    %v252 = vpop.f32.mrf.mxu0
    %v253 = vadd.f32 0.0, %v252
    %254 = vmatmul.f32.gmra.mxu0 %v215
    %v255 = vpop.f32.mrf.mxu0
    %v256 = vadd.f32 0.0, %v255
    %257 = vmatmul.f32.gmra.mxu0 %v218
    %v258 = vpop.f32.mrf.mxu0
    %v259 = vadd.f32 0.0, %v258
    %260 = vmatmul.f32.gmra.mxu0 %v221
    %v261 = vpop.f32.mrf.mxu0
    %v262 = vadd.f32 0.0, %v261
    %263 = vmatmul.f32.gmra.mxu0 %v224
    %v264 = vpop.f32.mrf.mxu0
    %v265 = vadd.f32 0.0, %v264
    %266 = vdwg.mxu0
    %v267 = vld [vmem:[%s1] sm:$0xff]
    %v268 = vld [vmem:[%s2] sm:$0xff]
    %v270 = vrot.slane %v267, 1
    %v271 = vrot.slane %v267, 2
    %v272 = vrot.slane %v267, 3
    %v273 = vrot.slane %v267, 4
    %v274 = vrot.slane %v267, 5
    %v275 = vrot.slane %v267, 6
    %v276 = vrot.slane %v267, 7
    %v284 = vstv %s43
    %v285 = vmul.f32 %v284, %v267
    %v286 = vmul.f32 %v284, %v270
    %v287 = vmul.f32 %v284, %v271
    %v288 = vmul.f32 %v284, %v272
    %v289 = vmul.f32 %v284, %v273
    %v290 = vmul.f32 %v284, %v274
    %v291 = vmul.f32 %v284, %v275
    %v292 = vmul.f32 %v284, %v276
    %s293 = ssub.f32 1.0, %s43
    %v294 = vstv %s293
    %v295 = vmul.f32 %v294, %v268
    %v304 = vperm.slane %v285, 0
    %v305 = vperm.slane %v286, 0
    %v306 = vperm.slane %v287, 0
    %v307 = vperm.slane %v288, 0
    %v308 = vperm.slane %v289, 0
    %v309 = vperm.slane %v290, 0
    %v310 = vperm.slane %v291, 0
    %v311 = vperm.slane %v292, 0
    %v320 = vsub.f32 %v304, %v295
    %v321 = vsub.f32 %v305, %v295
    %v322 = vsub.f32 %v306, %v295
    %v323 = vsub.f32 %v307, %v295
    %v324 = vsub.f32 %v308, %v295
    %v325 = vsub.f32 %v309, %v295
    %v326 = vsub.f32 %v310, %v295
    %v327 = vsub.f32 %v311, %v295
    %v328 = vand.u32 2147483647, %v320
    %v329 = vand.u32 2147483647, %v321
    %v330 = vand.u32 2147483647, %v322
    %v331 = vand.u32 2147483647, %v323
    %v332 = vand.u32 2147483647, %v324
    %v333 = vand.u32 2147483647, %v325
    %v334 = vand.u32 2147483647, %v326
    %v335 = vand.u32 2147483647, %v327
    %vm336 = vcmp.gt.f32.partialorder %v328, 0.0
    %vm337 = vcmp.gt.f32.partialorder %v329, 0.0
    %vm338 = vcmp.gt.f32.partialorder %v330, 0.0
    %vm339 = vcmp.gt.f32.partialorder %v331, 0.0
    %vm340 = vcmp.gt.f32.partialorder %v332, 0.0
    %vm341 = vcmp.gt.f32.partialorder %v333, 0.0
    %vm342 = vcmp.gt.f32.partialorder %v334, 0.0
    %vm343 = vcmp.gt.f32.partialorder %v335, 0.0
    %v344 = vsel %vm336, %v328, 1.0
    %v345 = vsel %vm337, %v329, 1.0
    %v346 = vsel %vm338, %v330, 1.0
    %v347 = vsel %vm339, %v331, 1.0
    %v348 = vsel %vm340, %v332, 1.0
    %v349 = vsel %vm341, %v333, 1.0
    %v350 = vsel %vm342, %v334, 1.0
    %v351 = vsel %vm343, %v335, 1.0
    %v352 = vlog2.pop %v344
    %v353 = vmul.f32 %v352, 0.6931472
    %v354 = vlog2.pop %v345
    %v355 = vmul.f32 %v354, 0.6931472
    %v356 = vlog2.pop %v346
    %v357 = vmul.f32 %v356, 0.6931472
    %v358 = vlog2.pop %v347
    %v359 = vmul.f32 %v358, 0.6931472
    %v360 = vlog2.pop %v348
    %v361 = vmul.f32 %v360, 0.6931472
    %v362 = vlog2.pop %v349
    %v363 = vmul.f32 %v362, 0.6931472
    %v364 = vlog2.pop %v350
    %v365 = vmul.f32 %v364, 0.6931472
    %v366 = vlog2.pop %v351
    %v367 = vmul.f32 %v366, 0.6931472
    %v368 = vstv %s44
    %v369 = vmul.f32 %v368, %v353
    %v370 = vmul.f32 %v368, %v355
    %v371 = vmul.f32 %v368, %v357
    %v372 = vmul.f32 %v368, %v359
    %v373 = vmul.f32 %v368, %v361
    %v374 = vmul.f32 %v368, %v363
    %v375 = vmul.f32 %v368, %v365
    %v376 = vmul.f32 %v368, %v367
    %v377 = vmul.f32 %v369, 1.442695
    %v378 = vpow.pop %v377
    %v379 = vmul.f32 %v370, 1.442695
    %v380 = vpow.pop %v379
    %v381 = vmul.f32 %v371, 1.442695
    %v382 = vpow.pop %v381
    %v383 = vmul.f32 %v372, 1.442695
    %v384 = vpow.pop %v383
    %v385 = vmul.f32 %v373, 1.442695
    %v386 = vpow.pop %v385
    %v387 = vmul.f32 %v374, 1.442695
    %v388 = vpow.pop %v387
    %v389 = vmul.f32 %v375, 1.442695
    %v390 = vpow.pop %v389
    %v391 = vmul.f32 %v376, 1.442695
    %v392 = vpow.pop %v391
    %v393 = vsel %vm336, %v378, 0.0
    %v394 = vsel %vm337, %v380, 0.0
    %v395 = vsel %vm338, %v382, 0.0
    %v396 = vsel %vm339, %v384, 0.0
    %v397 = vsel %vm340, %v386, 0.0
    %v398 = vsel %vm341, %v388, 0.0
    %v399 = vsel %vm342, %v390, 0.0
    %v400 = vsel %vm343, %v392, 0.0
    %v401 = vsel %vm150, %v244, 0.0
    %v402 = vrot.slane %v401, 4
    %v403 = vadd.f32 %v401, %v402
    %v404 = vrot.slane %v403, 2
    %v405 = vadd.f32 %v403, %v404
    %v406 = vrot.slane %v405, 1
    %v407 = vadd.f32 %v405, %v406
    %v408 = vsel %vm150, %v247, 0.0
    %v409 = vrot.slane %v408, 4
    %v410 = vadd.f32 %v408, %v409
    %v411 = vrot.slane %v410, 2
    %v412 = vadd.f32 %v410, %v411
    %v413 = vrot.slane %v412, 1
    %v414 = vadd.f32 %v412, %v413
    %v415 = vsel %vm150, %v250, 0.0
    %v416 = vrot.slane %v415, 4
    %v417 = vadd.f32 %v415, %v416
    %v418 = vrot.slane %v417, 2
    %v419 = vadd.f32 %v417, %v418
    %v420 = vrot.slane %v419, 1
    %v421 = vadd.f32 %v419, %v420
    %v422 = vsel %vm150, %v253, 0.0
    %v423 = vrot.slane %v422, 4
    %v424 = vadd.f32 %v422, %v423
    %v425 = vrot.slane %v424, 2
    %v426 = vadd.f32 %v424, %v425
    %v427 = vrot.slane %v426, 1
    %v428 = vadd.f32 %v426, %v427
    %v429 = vsel %vm150, %v256, 0.0
    %v430 = vrot.slane %v429, 4
    %v431 = vadd.f32 %v429, %v430
    %v432 = vrot.slane %v431, 2
    %v433 = vadd.f32 %v431, %v432
    %v434 = vrot.slane %v433, 1
    %v435 = vadd.f32 %v433, %v434
    %v436 = vsel %vm150, %v259, 0.0
    %v437 = vrot.slane %v436, 4
    %v438 = vadd.f32 %v436, %v437
    %v439 = vrot.slane %v438, 2
    %v440 = vadd.f32 %v438, %v439
    %v441 = vrot.slane %v440, 1
    %v442 = vadd.f32 %v440, %v441
    %v443 = vsel %vm150, %v262, 0.0
    %v444 = vrot.slane %v443, 4
    %v445 = vadd.f32 %v443, %v444
    %v446 = vrot.slane %v445, 2
    %v447 = vadd.f32 %v445, %v446
    %v448 = vrot.slane %v447, 1
    %v449 = vadd.f32 %v447, %v448
    %v450 = vsel %vm150, %v265, 0.0
    %v451 = vrot.slane %v450, 4
    %v452 = vadd.f32 %v450, %v451
    %v453 = vrot.slane %v452, 2
    %v454 = vadd.f32 %v452, %v453
    %v455 = vrot.slane %v454, 1
    %v456 = vadd.f32 %v454, %v455
    %vm457 = vcmp.ne.f32.partialorder %v407, 0.0
    %vm458 = vcmp.ne.f32.partialorder %v414, 0.0
    %vm459 = vcmp.ne.f32.partialorder %v421, 0.0
    %vm460 = vcmp.ne.f32.partialorder %v428, 0.0
    %vm461 = vcmp.ne.f32.partialorder %v435, 0.0
    %vm462 = vcmp.ne.f32.partialorder %v442, 0.0
    %vm463 = vcmp.ne.f32.partialorder %v449, 0.0
    %vm464 = vcmp.ne.f32.partialorder %v456, 0.0
    %v465 = vsel %vm457, %v407, 1.0
    %v466 = vsel %vm458, %v414, 1.0
    %v467 = vsel %vm459, %v421, 1.0
    %v468 = vsel %vm460, %v428, 1.0
    %v469 = vsel %vm461, %v435, 1.0
    %v470 = vsel %vm462, %v442, 1.0
    %v471 = vsel %vm463, %v449, 1.0
    %v472 = vsel %vm464, %v456, 1.0
    %v473 = vrcp.pop %v465
    %v474 = vrcp.pop %v466
    %v475 = vrcp.pop %v467
    %v476 = vrcp.pop %v468
    %v477 = vrcp.pop %v469
    %v478 = vrcp.pop %v470
    %v479 = vrcp.pop %v471
    %v480 = vrcp.pop %v472
    %v481 = vmul.f32 %v244, %v473
    %v482 = vmul.f32 %v247, %v474
    %v483 = vmul.f32 %v250, %v475
    %v484 = vmul.f32 %v253, %v476
    %v485 = vmul.f32 %v256, %v477
    %v486 = vmul.f32 %v259, %v478
    %v487 = vmul.f32 %v262, %v479
    %v488 = vmul.f32 %v265, %v480
    %v489 = vsel %vm457, 1, 0
    %v490 = vsel %vm458, 1, 0
    %v491 = vsel %vm459, 1, 0
    %v492 = vsel %vm460, 1, 0
    %v493 = vsel %vm461, 1, 0
    %v494 = vsel %vm462, 1, 0
    %v495 = vsel %vm463, 1, 0
    %v496 = vsel %vm464, 1, 0
    %vm497 = vcmp.eq.s32.totalorder %v489, 1
    %vm498 = vcmp.eq.s32.totalorder %v490, 1
    %vm499 = vcmp.eq.s32.totalorder %v491, 1
    %vm500 = vcmp.eq.s32.totalorder %v492, 1
    %vm501 = vcmp.eq.s32.totalorder %v493, 1
    %vm502 = vcmp.eq.s32.totalorder %v494, 1
    %vm503 = vcmp.eq.s32.totalorder %v495, 1
    %vm504 = vcmp.eq.s32.totalorder %v496, 1
    %v505 = vsel %vm497, %v481, 0.01
    %v506 = vsel %vm498, %v482, 0.01
    %v507 = vsel %vm499, %v483, 0.01
    %v508 = vsel %vm500, %v484, 0.01
    %v509 = vsel %vm501, %v485, 0.01
    %v510 = vsel %vm502, %v486, 0.01
    %v511 = vsel %vm503, %v487, 0.01
    %v512 = vsel %vm504, %v488, 0.01
    %514 = vset.pattern.permute.xlu0 20
    %515 = vperm.xlu0 %514, %v244
    %v516 = vpop.permute.xlu0 %515
    %519 = vset.pattern.permute.xlu0 20
    %520 = vperm.xlu0 %519, %v247
    %v521 = vpop.permute.xlu0 %520
    %524 = vset.pattern.permute.xlu0 20
    %525 = vperm.xlu0 %524, %v250
    %v526 = vpop.permute.xlu0 %525
    %529 = vset.pattern.permute.xlu0 20
    %530 = vperm.xlu0 %529, %v253
    %v531 = vpop.permute.xlu0 %530
    %534 = vset.pattern.permute.xlu0 20
    %535 = vperm.xlu0 %534, %v256
    %v536 = vpop.permute.xlu0 %535
    %539 = vset.pattern.permute.xlu0 20
    %540 = vperm.xlu0 %539, %v259
    %v541 = vpop.permute.xlu0 %540
    %544 = vset.pattern.permute.xlu0 20
    %545 = vperm.xlu0 %544, %v262
    %v546 = vpop.permute.xlu0 %545
    %549 = vset.pattern.permute.xlu0 20
    %550 = vperm.xlu0 %549, %v265
    %v551 = vpop.permute.xlu0 %550
    %v553 = vmul.f32 %v516, %v393
    %v554 = vmul.f32 %v521, %v394
    %v555 = vmul.f32 %v526, %v395
    %v556 = vmul.f32 %v531, %v396
    %v557 = vmul.f32 %v536, %v397
    %v558 = vmul.f32 %v541, %v398
    %v559 = vmul.f32 %v546, %v399
    %v560 = vmul.f32 %v551, %v400
    %v561 = vmul.f32 %v553, %v505
    %v562 = vmul.f32 %v554, %v506
    %v563 = vmul.f32 %v555, %v507
    %v564 = vmul.f32 %v556, %v508
    %v565 = vmul.f32 %v557, %v509
    %v566 = vmul.f32 %v558, %v510
    %v567 = vmul.f32 %v559, %v511
    %v568 = vmul.f32 %v560, %v512
    %v569 = vsel %vm150, %v561, 0.0
    %v570 = vrot.slane %v569, 4
    %v571 = vadd.f32 %v569, %v570
    %v572 = vrot.slane %v571, 2
    %v573 = vadd.f32 %v571, %v572
    %v574 = vrot.slane %v573, 1
    %v575 = vadd.f32 %v573, %v574
    %v576 = vsel %vm150, %v562, 0.0
    %v577 = vrot.slane %v576, 4
    %v578 = vadd.f32 %v576, %v577
    %v579 = vrot.slane %v578, 2
    %v580 = vadd.f32 %v578, %v579
    %v581 = vrot.slane %v580, 1
    %v582 = vadd.f32 %v580, %v581
    %v583 = vsel %vm150, %v563, 0.0
    %v584 = vrot.slane %v583, 4
    %v585 = vadd.f32 %v583, %v584
    %v586 = vrot.slane %v585, 2
    %v587 = vadd.f32 %v585, %v586
    %v588 = vrot.slane %v587, 1
    %v589 = vadd.f32 %v587, %v588
    %v590 = vsel %vm150, %v564, 0.0
    %v591 = vrot.slane %v590, 4
    %v592 = vadd.f32 %v590, %v591
    %v593 = vrot.slane %v592, 2
    %v594 = vadd.f32 %v592, %v593
    %v595 = vrot.slane %v594, 1
    %v596 = vadd.f32 %v594, %v595
    %v597 = vsel %vm150, %v565, 0.0
    %v598 = vrot.slane %v597, 4
    %v599 = vadd.f32 %v597, %v598
    %v600 = vrot.slane %v599, 2
    %v601 = vadd.f32 %v599, %v600
    %v602 = vrot.slane %v601, 1
    %v603 = vadd.f32 %v601, %v602
    %v604 = vsel %vm150, %v566, 0.0
    %v605 = vrot.slane %v604, 4
    %v606 = vadd.f32 %v604, %v605
    %v607 = vrot.slane %v606, 2
    %v608 = vadd.f32 %v606, %v607
    %v609 = vrot.slane %v608, 1
    %v610 = vadd.f32 %v608, %v609
    %v611 = vsel %vm150, %v567, 0.0
    %v612 = vrot.slane %v611, 4
    %v613 = vadd.f32 %v611, %v612
    %v614 = vrot.slane %v613, 2
    %v615 = vadd.f32 %v613, %v614
    %v616 = vrot.slane %v615, 1
    %v617 = vadd.f32 %v615, %v616
    %v618 = vsel %vm150, %v568, 0.0
    %v619 = vrot.slane %v618, 4
    %v620 = vadd.f32 %v618, %v619
    %v621 = vrot.slane %v620, 2
    %v622 = vadd.f32 %v620, %v621
    %v623 = vrot.slane %v622, 1
    %v624 = vadd.f32 %v622, %v623
    %vm633 = vcmask 1041409
    %v634 = vsel %vm633, %v582, %v575
    %vm635 = vcmask 1042434
    %v636 = vsel %vm635, %v589, %v634
    %vm637 = vcmask 1043459
    %v638 = vsel %vm637, %v596, %v636
    %vm639 = vcmask 1044484
    %v640 = vsel %vm639, %v603, %v638
    %vm641 = vcmask 1045509
    %v642 = vsel %vm641, %v610, %v640
    %vm643 = vcmask 1046534
    %v644 = vsel %vm643, %v617, %v642
    %vm645 = vcmask 1047559
    %v646 = vsel %vm645, %v624, %v644
    %647 = vrot.lane.b32.xlu0 %v646, 20
    %v648 = vpop.permute.xlu0 %647
    %v650 = vsel %vm150, %v267, %v648
    %v651 = vld [vmem:[%s7] sm:$0xff]
    %v652 = vld [vmem:[%s7 + $0x8] sm:$0xff]
    %v653 = vld [vmem:[%s7 + $0x10] sm:$0xff]
    %v654 = vld [vmem:[%s7 + $0x18] sm:$0xff]
    %v655 = vld [vmem:[%s7 + $0x20] sm:$0xff]
    %v656 = vld [vmem:[%s7 + $0x28] sm:$0x1]
    %v657 = vperm.slane %v656, 0
    %vm658 = vcmask 326656
    %v660 = vsel %vm658, %v650, 0
    %662 = vmatpush.msra.mxu0 0.0
    %663 = vmatpush.msra.mxu0 0.0
    %664 = vmatpush.msra.mxu0 0.0
    %665 = vmatpush.msra.mxu0 0.0
    %666 = vmatpush.msra.mxu0 0.0
    %667 = vmatpush.msra.mxu0 0.0
    %668 = vmatpush.msra.mxu0 0.0
    %669 = vmatpush.msra.mxu0 0.0
    %670 = vmatpush.msra.mxu0 0.0
    %671 = vmatpush.msra.mxu0 0.0
    %672 = vmatpush.msra.mxu0 0.0
    %673 = vmatpush.msra.mxu0 %v655
    %674 = vmatpush.msra.mxu0 %v654
    %675 = vmatpush.msra.mxu0 %v653
    %676 = vmatpush.msra.mxu0 %v652
    %677 = vmatpush.msra.mxu0 %v651
    %678 = vmatmul.f32.gmra.mxu0 %v660
    %v679 = vpop.f32.mrf.mxu0
    %v680 = vadd.f32 %v657, %v679
    %681 = vdwg.mxu0
    %v682 = vxor.u32 %v680, 2147483648
    %v683 = vmul.f32 %v682, 1.442695
    %v684 = vpow.pop %v683
    %v685 = vadd.f32 %v684, 1.0
    %v686 = vrcp.pop %v685
    %v687 = vmul.f32 %v685, %v686
    %v688 = vsub.f32 1.0, %v687
    %v689 = vmul.f32 %v686, %v688
    %v690 = vadd.f32 %v686, %v689
    %vm691 = vweird.f32 %v685
    %vm692 = vweird.f32 %v686
    %vm693 = vmor %vm691, %vm692
    %v694 = vsel %vm693, %v686, %v690
    %v695 = vand.u32 2147483647, %v685
    %vm696 = vcmp.eq.f32.partialorder %v695, 8.507059e+37
    %v697 = vand.u32 %v685, 2147483648
    %v698 = vor.u32 1.1754944e-38, %v697
    %v699 = vsel %vm696, %v698, %v694
    %v700 = vmul.f32 1.0, %v699
    %v701 = vsel %vm150, %v700, %v648
    %702 = vst.msk [vmem:[#allocation5] sm:$0xff] %vm658, %v701
    // Predicated region
    $region38: #{tpu_custom_call.1} parent=1 // pred_check
      _
    $region39: #{tpu_custom_call.1} parent=1 // pred_check_branch
      %704 = sbr.rel (0) target = $region41
    $region40: #{tpu_custom_call.1} parent=1 // pred_region
      %706 = vsyncadd [#allocation3], 0
      %s708 = sshll.u32 [#allocation5], 4
      %s709 = int_to_ptr.vmem [resolvable:$true] %s708
      %s710 = sshll.u32 %s8, 4
      %s711 = int_to_ptr.hbm [resolvable:$true] %s710
      %713 = dma.vmem_to_hbm [thread:$0]  %s709, 128, %s711, [#allocation3]
    $region41: #{tpu_custom_call.1} parent=1 // pred_fallthru
      _
    // Predicated region
    $region42: #{tpu_custom_call.1} parent=1 // pred_check
      _
    $region43: #{tpu_custom_call.1} parent=1 // pred_check_branch
      %715 = sbr.rel (0) target = $region45
    $region44: #{tpu_custom_call.1} parent=1 // pred_region
      %717 = dma.done [#allocation3], 128
    $region45: #{tpu_custom_call.1} parent=1 // pred_fallthru
      _
    %718 = vsyncpa [#allocation3], 1
    %719 = vsyncpa [#allocation4], 1

</llo_original>
